<compile_context>
chip_gen: v5e
topology: v5e:2x2
jax: 0.10.0
libtpu: 0.0.40
codegen_flags: <defaults>
</compile_context>

<pallas_src>
import functools

import jax
import jax.numpy as jnp
from jax import lax
from jax.experimental import pallas as pl
from jax.experimental.pallas import tpu as pltpu


def make_positional_encoding(d_model, max_len):
    """Matches PositionalEncoding.__init__ exactly."""
    pos = jnp.arange(max_len, dtype=jnp.float32)[:, None]            # (max_len, 1)
    _2i = jnp.arange(0, d_model, 2, dtype=jnp.float32)               # (d_model//2,)
    angle = pos / jnp.power(10000.0, _2i / float(d_model))           # (max_len, d_model//2)
    enc = jnp.zeros((max_len, d_model), dtype=jnp.float32)
    enc = enc.at[:, 0::2].set(jnp.sin(angle))
    enc = enc.at[:, 1::2].set(jnp.cos(angle))
    return enc


def _pick_seq_tile(S, requested):
    """Sequence tile must be a multiple of 8 (f32 sublane tiling) or equal S."""
    if requested is not None:
        assert S % requested == 0, "seq_len must be divisible by the sequence tile"
        assert requested == S or requested % 8 == 0, (
            "sequence tile must be a multiple of 8 or equal to seq_len")
        return requested
    if S <= 512:
        return S                         # full extent is always a legal block dim
    for ts in (512, 256, 128, 64, 32, 16, 8):
        if S % ts == 0:
            return ts
    return S


def _vmem_table_kernel(ids_ref, emb_ref, pos_ref, out_ref,
                       *, seq_len, seq_tile, vocab, unroll):
    """Fast path: embedding table fully resident in VMEM.

    Rows are gathered with dynamic sublane slices directly into the output
    block, with the positional add fused per row (no separate staging buffer,
    no HBM row DMAs)."""
    s = pl.program_id(0)
    b = pl.program_id(1)
    base = b * seq_len + s * seq_tile

    def body(i, carry):
        tok = ids_ref[base + i]
        # Clamp like jnp.take (PyTorch would raise on out-of-range ids).
        tok = jnp.clip(tok, 0, vocab - 1)
        row = emb_ref[pl.ds(tok, 1), :].astype(jnp.float32)
        out_ref[0, pl.ds(i, 1), :] = (row + pos_ref[pl.ds(i, 1), :]).astype(out_ref.dtype)
        return carry

    lax.fori_loop(0, seq_tile, body, 0, unroll=unroll)


def _hbm_gather_kernel(ids_ref, emb_hbm, pos_ref, out_ref, gathered, sem,
                       *, seq_len, seq_tile, vocab, unroll):
    """Large-table fallback: true HBM row gather, single shared DMA semaphore."""
    s = pl.program_id(0)
    b = pl.program_id(1)
    base = b * seq_len + s * seq_tile

    # Issue all row-gather DMAs on ONE shared semaphore so they are in flight
    # concurrently (DMA-semaphore accounting is by byte count).
    def issue(i, carry):
        tok = ids_ref[base + i]
        tok = jnp.clip(tok, 0, vocab - 1)        # also guards against OOB HBM DMA
        pltpu.make_async_copy(
            emb_hbm.at[pl.ds(tok, 1), :],
            gathered.at[pl.ds(i, 1), :],
            sem,
        ).start()
        return carry

    lax.fori_loop(0, seq_tile, issue, 0, unroll=unroll)

    # Single combined wait: one descriptor whose byte count (TS * D * itemsize)
    # equals the sum of the TS row copies started above.
    pltpu.make_async_copy(
        emb_hbm.at[pl.ds(0, seq_tile), :],
        gathered,
        sem,
    ).wait()

    # Positional add; dropout is identity in eval mode.
    out_ref[0] = (gathered[...].astype(jnp.float32) + pos_ref[...]).astype(out_ref.dtype)


def transformer_embedding(ids, emb_weight, pos_encoding, *, seq_tile=None,
                          vmem_table_budget_bytes=24 * 1024 * 1024,
                          force_hbm_gather=False):
    """ids: (B, S) int; emb_weight: (V, D); pos_encoding: (max_len, D).

    Returns (B, S, D) f32 = emb_weight[ids] + pos_encoding[:S]
    (eval-mode dropout == identity).
    """
    B, S = ids.shape
    V, D = emb_weight.shape
    assert pos_encoding.shape[0] >= S and pos_encoding.shape[1] == D

    pos = pos_encoding[:S, :].astype(jnp.float32)          # PositionalEncoding.forward
    TS = _pick_seq_tile(S, seq_tile)
    unroll = min(TS, 8)

    table_bytes = V * D * emb_weight.dtype.itemsize
    # Budget against a (possibly double-buffered) resident table; the 24 MiB
    # default is conservative even for v7x's 64 MiB physical VMEM.
    use_vmem_table = (not force_hbm_gather) and (2 * table_bytes <= vmem_table_budget_bytes)

    ids_flat = ids.reshape(-1).astype(jnp.int32)            # 1-D SMEM scalars

    # Grid (S//TS, B): batch varies fastest, so the pos tile's block index is
    # constant across consecutive steps and Pallas fetches it only once per s.
    grid = (S // TS, B)
    pos_spec = pl.BlockSpec((TS, D), lambda s, b, ids: (s, 0))
    out_spec = pl.BlockSpec((1, TS, D), lambda s, b, ids: (b, s, 0))

    if use_vmem_table:
        kernel = functools.partial(_vmem_table_kernel, seq_len=S, seq_tile=TS,
                                   vocab=V, unroll=unroll)
        # Whole table as one block with a constant index -> staged in VMEM once.
        emb_spec = pl.BlockSpec((V, D), lambda s, b, ids: (0, 0))
        scratch_shapes = []
    else:
        assert V >= TS, "HBM gather path needs vocab >= sequence tile"
        kernel = functools.partial(_hbm_gather_kernel, seq_len=S, seq_tile=TS,
                                   vocab=V, unroll=unroll)
        emb_spec = pl.BlockSpec(memory_space=pl.ANY)        # table stays in HBM, no auto-DMA
        scratch_shapes = [
            pltpu.VMEM((TS, D), emb_weight.dtype),          # gather landing buffer
            pltpu.SemaphoreType.DMA,                        # ONE shared DMA semaphore
        ]

    # Rough per-call VMEM footprint; only raise the scoped limit when the
    # generation defaults (16/32 MiB) would not cover it.
    vmem_est = 2 * 2 * (TS * D * 4)                         # pos tile + out block, 2 buffers each
    vmem_est += 2 * table_bytes if use_vmem_table else TS * D * emb_weight.dtype.itemsize
    cp_kwargs = dict(dimension_semantics=("parallel", "parallel"))
    if vmem_est > 12 * 1024 * 1024:
        cp_kwargs["vmem_limit_bytes"] = min(int(vmem_est * 2), 100 * 1024 * 1024)

    return pl.pallas_call(
        kernel,
        out_shape=jax.ShapeDtypeStruct((B, S, D), jnp.float32),
        grid_spec=pltpu.PrefetchScalarGridSpec(
            num_scalar_prefetch=1,                          # ids -> SMEM scalars
            grid=grid,
            in_specs=[emb_spec, pos_spec],
            out_specs=out_spec,
            scratch_shapes=scratch_shapes,
        ),
        compiler_params=pltpu.CompilerParams(**cp_kwargs),
    )(ids_flat, emb_weight, pos)


if __name__ == "__main__":
    # Small shapes consistent with the module's forward; d_model=128 keeps the
    # output lane-dense (last dim a multiple of 128).
    vocab_size = 64
    d_model = 128
    max_len = 16
    batch = 2
    seq_len = 8
    # drop_prob = 0.1  # dropout is identity in eval mode

    key = jax.random.PRNGKey(0)
    k_emb, k_ids = jax.random.split(key)

    # nn.Embedding init ~ N(0, 1); padding_idx=1 row is zeroed.
    emb_weight = jax.random.normal(k_emb, (vocab_size, d_model), dtype=jnp.float32)
    emb_weight = emb_weight.at[1, :].set(0.0)

    pos_encoding = make_positional_encoding(d_model, max_len)

    ids = jax.random.randint(k_ids, (batch, seq_len), 0, vocab_size, dtype=jnp.int32)
    ids = ids.at[0, 3].set(1)  # exercise the padding_idx row

    # Pure-JAX reference for the forward pass (eval-mode dropout == identity).
    ref = emb_weight[ids] + pos_encoding[:seq_len][None, :, :]

    # Fast path: embedding table resident in VMEM (used whenever it fits).
    out = transformer_embedding(ids, emb_weight, pos_encoding)
    out = jax.block_until_ready(out)
    assert out.shape == (batch, seq_len, d_model)
    assert out.dtype == jnp.float32
    assert jnp.allclose(out, ref, atol=1e-5, rtol=1e-5)

    # Large-table fallback: HBM row gather with one shared DMA semaphore and a
    # single combined wait (exercised here to keep both paths tested).
    out_hbm = transformer_embedding(ids, emb_weight, pos_encoding, force_hbm_gather=True)
    out_hbm = jax.block_until_ready(out_hbm)
    assert jnp.allclose(out_hbm, ref, atol=1e-5, rtol=1e-5)

    print("KERNEL_OK")
</pallas_src>

<mosaic_0001>
module attributes {stable_mosaic.version = 11 : i64} {
  func.func @_vmem_table_kernel(%arg0: i32, %arg1: i32, %arg2: memref<16xi32, #tpu.memory_space<smem>>, %arg3: memref<64x128xf32, #tpu.memory_space<vmem>>, %arg4: memref<8x128xf32, #tpu.memory_space<vmem>>, %arg5: memref<1x8x128xf32, #tpu.memory_space<vmem>>) attributes {dimension_semantics = [#tpu.dimension_semantics<parallel>, #tpu.dimension_semantics<parallel>], iteration_bounds = array<i64: 1, 2>, scalar_prefetch = 1 : i64, scratch_operands = 0 : i64, tpu.core_type = #tpu.core_type<tc>, window_params = [{pipeline_mode = #tpu.pipeline_mode<synchronous>, transform_indices = @transform_0, window_bounds = array<i64: 64, 128>}, {transform_indices = @transform_1, window_bounds = array<i64: 8, 128>}, {transform_indices = @transform_2, window_bounds = array<i64: 1, 8, 128>}]} {
    %c8_i32 = arith.constant 8 : i32
    %0 = arith.muli %arg1, %c8_i32 : i32
    %c8_i32_0 = arith.constant 8 : i32
    %1 = arith.muli %arg0, %c8_i32_0 : i32
    %2 = arith.addi %0, %1 : i32
    %c0_i32 = arith.constant 0 : i32
    %3 = arith.addi %2, %c0_i32 : i32
    %4 = arith.index_cast %3 : i32 to index
    %5 = memref.load %arg2[%4] : memref<16xi32, #tpu.memory_space<smem>>
    %c0_i32_1 = arith.constant 0 : i32
    %c63_i32 = arith.constant 63 : i32
    %6 = arith.maxsi %c0_i32_1, %5 : i32
    %7 = arith.minsi %c63_i32, %6 : i32
    %8 = arith.index_cast %7 : i32 to index
    %c0 = arith.constant 0 : index
    %9 = vector.load %arg3[%8, %c0] : memref<64x128xf32, #tpu.memory_space<vmem>>, vector<1x128xf32>
    %10 = arith.index_cast %c0_i32 : i32 to index
    %c0_2 = arith.constant 0 : index
    %11 = vector.load %arg4[%10, %c0_2] : memref<8x128xf32, #tpu.memory_space<vmem>>, vector<1x128xf32>
    %12 = arith.addf %9, %11 : vector<1x128xf32>
    %c0_3 = arith.constant 0 : index
    %13 = arith.index_cast %c0_i32 : i32 to index
    %c0_4 = arith.constant 0 : index
    %14 = vector.load %arg5[%c0_3, %13, %c0_4] : memref<1x8x128xf32, #tpu.memory_space<vmem>>, vector<1x1x128xf32>
    %15 = vector.shape_cast %14 : vector<1x1x128xf32> to vector<1x128xf32>
    %16 = vector.shape_cast %12 : vector<1x128xf32> to vector<1x1x128xf32>
    tpu.vector_store %arg5[%c0_3, %13, %c0_4], %16 {strides = array<i32>} : memref<1x8x128xf32, #tpu.memory_space<vmem>>, vector<1x1x128xf32>,
    %c1_i32 = arith.constant 1 : i32
    %17 = arith.addi %2, %c1_i32 : i32
    %18 = arith.index_cast %17 : i32 to index
    %19 = memref.load %arg2[%18] : memref<16xi32, #tpu.memory_space<smem>>
    %c0_i32_5 = arith.constant 0 : i32
    %c63_i32_6 = arith.constant 63 : i32
    %20 = arith.maxsi %c0_i32_5, %19 : i32
    %21 = arith.minsi %c63_i32_6, %20 : i32
    %22 = arith.index_cast %21 : i32 to index
    %c0_7 = arith.constant 0 : index
    %23 = vector.load %arg3[%22, %c0_7] : memref<64x128xf32, #tpu.memory_space<vmem>>, vector<1x128xf32>
    %24 = arith.index_cast %c1_i32 : i32 to index
    %c0_8 = arith.constant 0 : index
    %25 = vector.load %arg4[%24, %c0_8] : memref<8x128xf32, #tpu.memory_space<vmem>>, vector<1x128xf32>
    %26 = arith.addf %23, %25 : vector<1x128xf32>
    %c0_9 = arith.constant 0 : index
    %27 = arith.index_cast %c1_i32 : i32 to index
    %c0_10 = arith.constant 0 : index
    %28 = vector.load %arg5[%c0_9, %27, %c0_10] : memref<1x8x128xf32, #tpu.memory_space<vmem>>, vector<1x1x128xf32>
    %29 = vector.shape_cast %28 : vector<1x1x128xf32> to vector<1x128xf32>
    %30 = vector.shape_cast %26 : vector<1x128xf32> to vector<1x1x128xf32>
    tpu.vector_store %arg5[%c0_9, %27, %c0_10], %30 {strides = array<i32>} : memref<1x8x128xf32, #tpu.memory_space<vmem>>, vector<1x1x128xf32>,
    %c2_i32 = arith.constant 2 : i32
    %31 = arith.addi %2, %c2_i32 : i32
    %32 = arith.index_cast %31 : i32 to index
    %33 = memref.load %arg2[%32] : memref<16xi32, #tpu.memory_space<smem>>
    %c0_i32_11 = arith.constant 0 : i32
    %c63_i32_12 = arith.constant 63 : i32
    %34 = arith.maxsi %c0_i32_11, %33 : i32
    %35 = arith.minsi %c63_i32_12, %34 : i32
    %36 = arith.index_cast %35 : i32 to index
    %c0_13 = arith.constant 0 : index
    %37 = vector.load %arg3[%36, %c0_13] : memref<64x128xf32, #tpu.memory_space<vmem>>, vector<1x128xf32>
    %38 = arith.index_cast %c2_i32 : i32 to index
    %c0_14 = arith.constant 0 : index
    %39 = vector.load %arg4[%38, %c0_14] : memref<8x128xf32, #tpu.memory_space<vmem>>, vector<1x128xf32>
    %40 = arith.addf %37, %39 : vector<1x128xf32>
    %c0_15 = arith.constant 0 : index
    %41 = arith.index_cast %c2_i32 : i32 to index
    %c0_16 = arith.constant 0 : index
    %42 = vector.load %arg5[%c0_15, %41, %c0_16] : memref<1x8x128xf32, #tpu.memory_space<vmem>>, vector<1x1x128xf32>
    %43 = vector.shape_cast %42 : vector<1x1x128xf32> to vector<1x128xf32>
    %44 = vector.shape_cast %40 : vector<1x128xf32> to vector<1x1x128xf32>
    tpu.vector_store %arg5[%c0_15, %41, %c0_16], %44 {strides = array<i32>} : memref<1x8x128xf32, #tpu.memory_space<vmem>>, vector<1x1x128xf32>,
    %c3_i32 = arith.constant 3 : i32
    %45 = arith.addi %2, %c3_i32 : i32
    %46 = arith.index_cast %45 : i32 to index
    %47 = memref.load %arg2[%46] : memref<16xi32, #tpu.memory_space<smem>>
    %c0_i32_17 = arith.constant 0 : i32
    %c63_i32_18 = arith.constant 63 : i32
    %48 = arith.maxsi %c0_i32_17, %47 : i32
    %49 = arith.minsi %c63_i32_18, %48 : i32
    %50 = arith.index_cast %49 : i32 to index
    %c0_19 = arith.constant 0 : index
    %51 = vector.load %arg3[%50, %c0_19] : memref<64x128xf32, #tpu.memory_space<vmem>>, vector<1x128xf32>
    %52 = arith.index_cast %c3_i32 : i32 to index
    %c0_20 = arith.constant 0 : index
    %53 = vector.load %arg4[%52, %c0_20] : memref<8x128xf32, #tpu.memory_space<vmem>>, vector<1x128xf32>
    %54 = arith.addf %51, %53 : vector<1x128xf32>
    %c0_21 = arith.constant 0 : index
    %55 = arith.index_cast %c3_i32 : i32 to index
    %c0_22 = arith.constant 0 : index
    %56 = vector.load %arg5[%c0_21, %55, %c0_22] : memref<1x8x128xf32, #tpu.memory_space<vmem>>, vector<1x1x128xf32>
    %57 = vector.shape_cast %56 : vector<1x1x128xf32> to vector<1x128xf32>
    %58 = vector.shape_cast %54 : vector<1x128xf32> to vector<1x1x128xf32>
    tpu.vector_store %arg5[%c0_21, %55, %c0_22], %58 {strides = array<i32>} : memref<1x8x128xf32, #tpu.memory_space<vmem>>, vector<1x1x128xf32>,
    %c4_i32 = arith.constant 4 : i32
    %59 = arith.addi %2, %c4_i32 : i32
    %60 = arith.index_cast %59 : i32 to index
    %61 = memref.load %arg2[%60] : memref<16xi32, #tpu.memory_space<smem>>
    %c0_i32_23 = arith.constant 0 : i32
    %c63_i32_24 = arith.constant 63 : i32
    %62 = arith.maxsi %c0_i32_23, %61 : i32
    %63 = arith.minsi %c63_i32_24, %62 : i32
    %64 = arith.index_cast %63 : i32 to index
    %c0_25 = arith.constant 0 : index
    %65 = vector.load %arg3[%64, %c0_25] : memref<64x128xf32, #tpu.memory_space<vmem>>, vector<1x128xf32>
    %66 = arith.index_cast %c4_i32 : i32 to index
    %c0_26 = arith.constant 0 : index
    %67 = vector.load %arg4[%66, %c0_26] : memref<8x128xf32, #tpu.memory_space<vmem>>, vector<1x128xf32>
    %68 = arith.addf %65, %67 : vector<1x128xf32>
    %c0_27 = arith.constant 0 : index
    %69 = arith.index_cast %c4_i32 : i32 to index
    %c0_28 = arith.constant 0 : index
    %70 = vector.load %arg5[%c0_27, %69, %c0_28] : memref<1x8x128xf32, #tpu.memory_space<vmem>>, vector<1x1x128xf32>
    %71 = vector.shape_cast %70 : vector<1x1x128xf32> to vector<1x128xf32>
    %72 = vector.shape_cast %68 : vector<1x128xf32> to vector<1x1x128xf32>
    tpu.vector_store %arg5[%c0_27, %69, %c0_28], %72 {strides = array<i32>} : memref<1x8x128xf32, #tpu.memory_space<vmem>>, vector<1x1x128xf32>,
    %c5_i32 = arith.constant 5 : i32
    %73 = arith.addi %2, %c5_i32 : i32
    %74 = arith.index_cast %73 : i32 to index
    %75 = memref.load %arg2[%74] : memref<16xi32, #tpu.memory_space<smem>>
    %c0_i32_29 = arith.constant 0 : i32
    %c63_i32_30 = arith.constant 63 : i32
    %76 = arith.maxsi %c0_i32_29, %75 : i32
    %77 = arith.minsi %c63_i32_30, %76 : i32
    %78 = arith.index_cast %77 : i32 to index
    %c0_31 = arith.constant 0 : index
    %79 = vector.load %arg3[%78, %c0_31] : memref<64x128xf32, #tpu.memory_space<vmem>>, vector<1x128xf32>
    %80 = arith.index_cast %c5_i32 : i32 to index
    %c0_32 = arith.constant 0 : index
    %81 = vector.load %arg4[%80, %c0_32] : memref<8x128xf32, #tpu.memory_space<vmem>>, vector<1x128xf32>
    %82 = arith.addf %79, %81 : vector<1x128xf32>
    %c0_33 = arith.constant 0 : index
    %83 = arith.index_cast %c5_i32 : i32 to index
    %c0_34 = arith.constant 0 : index
    %84 = vector.load %arg5[%c0_33, %83, %c0_34] : memref<1x8x128xf32, #tpu.memory_space<vmem>>, vector<1x1x128xf32>
    %85 = vector.shape_cast %84 : vector<1x1x128xf32> to vector<1x128xf32>
    %86 = vector.shape_cast %82 : vector<1x128xf32> to vector<1x1x128xf32>
    tpu.vector_store %arg5[%c0_33, %83, %c0_34], %86 {strides = array<i32>} : memref<1x8x128xf32, #tpu.memory_space<vmem>>, vector<1x1x128xf32>,
    %c6_i32 = arith.constant 6 : i32
    %87 = arith.addi %2, %c6_i32 : i32
    %88 = arith.index_cast %87 : i32 to index
    %89 = memref.load %arg2[%88] : memref<16xi32, #tpu.memory_space<smem>>
    %c0_i32_35 = arith.constant 0 : i32
    %c63_i32_36 = arith.constant 63 : i32
    %90 = arith.maxsi %c0_i32_35, %89 : i32
    %91 = arith.minsi %c63_i32_36, %90 : i32
    %92 = arith.index_cast %91 : i32 to index
    %c0_37 = arith.constant 0 : index
    %93 = vector.load %arg3[%92, %c0_37] : memref<64x128xf32, #tpu.memory_space<vmem>>, vector<1x128xf32>
    %94 = arith.index_cast %c6_i32 : i32 to index
    %c0_38 = arith.constant 0 : index
    %95 = vector.load %arg4[%94, %c0_38] : memref<8x128xf32, #tpu.memory_space<vmem>>, vector<1x128xf32>
    %96 = arith.addf %93, %95 : vector<1x128xf32>
    %c0_39 = arith.constant 0 : index
    %97 = arith.index_cast %c6_i32 : i32 to index
    %c0_40 = arith.constant 0 : index
    %98 = vector.load %arg5[%c0_39, %97, %c0_40] : memref<1x8x128xf32, #tpu.memory_space<vmem>>, vector<1x1x128xf32>
    %99 = vector.shape_cast %98 : vector<1x1x128xf32> to vector<1x128xf32>
    %100 = vector.shape_cast %96 : vector<1x128xf32> to vector<1x1x128xf32>
    tpu.vector_store %arg5[%c0_39, %97, %c0_40], %100 {strides = array<i32>} : memref<1x8x128xf32, #tpu.memory_space<vmem>>, vector<1x1x128xf32>,
    %c7_i32 = arith.constant 7 : i32
    %101 = arith.addi %2, %c7_i32 : i32
    %102 = arith.index_cast %101 : i32 to index
    %103 = memref.load %arg2[%102] : memref<16xi32, #tpu.memory_space<smem>>
    %c0_i32_41 = arith.constant 0 : i32
    %c63_i32_42 = arith.constant 63 : i32
    %104 = arith.maxsi %c0_i32_41, %103 : i32
    %105 = arith.minsi %c63_i32_42, %104 : i32
    %106 = arith.index_cast %105 : i32 to index
    %c0_43 = arith.constant 0 : index
    %107 = vector.load %arg3[%106, %c0_43] : memref<64x128xf32, #tpu.memory_space<vmem>>, vector<1x128xf32>
    %108 = arith.index_cast %c7_i32 : i32 to index
    %c0_44 = arith.constant 0 : index
    %109 = vector.load %arg4[%108, %c0_44] : memref<8x128xf32, #tpu.memory_space<vmem>>, vector<1x128xf32>
    %110 = arith.addf %107, %109 : vector<1x128xf32>
    %c0_45 = arith.constant 0 : index
    %111 = arith.index_cast %c7_i32 : i32 to index
    %c0_46 = arith.constant 0 : index
    %112 = vector.load %arg5[%c0_45, %111, %c0_46] : memref<1x8x128xf32, #tpu.memory_space<vmem>>, vector<1x1x128xf32>
    %113 = vector.shape_cast %112 : vector<1x1x128xf32> to vector<1x128xf32>
    %114 = vector.shape_cast %110 : vector<1x128xf32> to vector<1x1x128xf32>
    tpu.vector_store %arg5[%c0_45, %111, %c0_46], %114 {strides = array<i32>} : memref<1x8x128xf32, #tpu.memory_space<vmem>>, vector<1x1x128xf32>,
    %c8_i32_47 = arith.constant 8 : i32
    return
  }
  func.func @transform_0(%arg0: i32, %arg1: i32, %arg2: memref<16xi32, #tpu.memory_space<smem>>) -> (i32, i32) {
    %c0_i32 = arith.constant 0 : i32
    %c0_i32_0 = arith.constant 0 : i32
    %c0_i32_1 = arith.constant 0 : i32
    return %c0_i32, %c0_i32_0 : i32, i32
  }
  func.func @transform_1(%arg0: i32, %arg1: i32, %arg2: memref<16xi32, #tpu.memory_space<smem>>) -> (i32, i32) {
    %c0_i32 = arith.constant 0 : i32
    %c0_i32_0 = arith.constant 0 : i32
    return %arg0, %c0_i32 : i32, i32
  }
  func.func @transform_2(%arg0: i32, %arg1: i32, %arg2: memref<16xi32, #tpu.memory_space<smem>>) -> (i32, i32, i32) {
    %c0_i32 = arith.constant 0 : i32
    %c0_i32_0 = arith.constant 0 : i32
    return %arg1, %arg0, %c0_i32 : i32, i32, i32
  }
}

</mosaic_0001>

<llo_original>
// kernel: tpu_custom_call.1
$region0: #{tpu_custom_call.1}
  #allocation0 [shape = 'u32[]', space=smem, size = 0x4, offset = 0x4, fixed_abs, tag = 'smem constant byte address 0x4 - core index']
  #allocation1 [shape = 'u32[72,128]{1,0:T(1,128)}', space=vmem, size = 0x9000, scoped, tag = 'internal scratch']
  #allocation2 [shape = 's32[1]{0}', space=sflag, size = 0x4, scoped, tag = 'scoped memory for tpu_custom_call.1']
  #allocation3 [shape = 'u8[512]{0}', space=smem, size = 0x200, scoped, tag = 'prefetched SMEM operand 0']
  %s0 = inlined_call_operand.hbm [shape: s32[16], index: 0, kind: input, shape index: {}]
  %s1 = inlined_call_operand.hbm [shape: f32[64,128], index: 1, kind: input, shape index: {}]
  %s2 = inlined_call_operand.hbm [shape: f32[8,128], index: 2, kind: input, shape index: {}]
  %s3 = inlined_call_operand.hbm [shape: f32[2,8,128], index: 3, kind: output, shape index: {}]
  %s4 = sld [smem:[#allocation0]]
  $region49: #{tpu_custom_call.1} parent=0
    _
  %s6 = ssub.s32 1, %s4
  %s7 = scalar_select 0, %s6, %s4
  %s9 = sshll.u32 %s0, 4
  %s10 = int_to_ptr.hbm [resolvable:$true] %s9
  %12 = dma.hbm_to_smem %s10, 16, [#allocation3], [#allocation2]
  %14 = dma.done [#allocation2], 16
  %15 = sfence
  $region1: #{tpu_custom_call.1} parent=0
    #allocation4 [shape = 'u8[32768]{0}', space=vmem, size = 0x8000, scoped, tag = 'input window, operand 1, single buffered']
    #allocation5 [shape = 's32[2]{0}', space=sflag, size = 0x8, scoped, tag = 'scoped memory for tpu_custom_call.1']
    #allocation6 [shape = 's32[2]{0}', space=sflag, size = 0x8, scoped, tag = 'scoped memory for tpu_custom_call.1']
    #allocation7 [shape = 'u8[4096]{0}', space=vmem, size = 0x1000, scoped, tag = 'input window, operand 2, single buffered']
    #allocation8 [shape = 's32[1]{0}', space=sflag, size = 0x4, scoped, tag = 'scoped memory for tpu_custom_call.1']
    #allocation9 [shape = 'u8[8192]{0}', space=vmem, size = 0x2000, scoped, tag = 'output window, operand 0']
    %16 = vsyncpa [#allocation5], 0
    %17 = vsyncpa [#allocation8], 0
    %18 = vsyncpa [#allocation6], 0
    %s19 = scalar_lea.sflag [#allocation6], 1
    %20 = vsyncpa %s19, 0
    loop: start=0, step=1, limit=4
    $region2: #{tpu_custom_call.1} parent=1 // loop_pre_header
      _
    $region3: #{tpu_custom_call.1} parent=1 // loop_header
      %s22 = sphi 0, %s26
      %p23 = scmp.ge.s32.totalorder %s22, 4
      %s29 = sphi 0, %s41
      %s30 = sphi 0, %s37
      %s31 = sphi 0, %s29
      %s32 = sphi 0, %s30
      %s33 = sphi 0, %s31
      %s34 = sphi 0, %s32
      %s42 = sphi 0, %s42
      %s44 = sphi 0, %s42
      %s45 = sphi 0, %s44
      %s59 = sphi 0, %s45
      %s65 = sphi 0, %s67
      %s68 = sphi 0, %s65
      %s69 = sphi 0, %s68
      %s85 = sphi 0, %s69
      %s93 = sphi 0, %s95
      %s96 = sphi 0, %s93
      %s97 = sphi 0, %s96
      %s113 = sphi 0, %s97
    $region4: #{tpu_custom_call.1} parent=1 // loop_header_branch
      %25 = sbr.rel (%p23) target = $region8
    $region5: #{tpu_custom_call.1} parent=1 // loop_body
      %s27 = ssub.s32 %s22, 1
      %s28 = ssub.s32 %s22, 2
      %s35 = sadd.s32 1, %s30
      %p36 = scmp.ge.s32.totalorder %s35, 2
      %s37 = scalar_select %p36, 0, %s35
      %s38 = sadd.s32 1, %s29
      %s39 = scalar_select %p36, %s38, %s29
      %p40 = scmp.ge.s32.totalorder %s39, 1
      %s41 = scalar_select %p40, 0, %s39
      %s43 = sadd.s32 %s42, 1
      %p46 = scmp.eq.s32.totalorder %s22, 1
      %p47 = scmp.ne.s32.totalorder %s42, %s44
      %p48 = scmp.eq.s32.totalorder %s22, 0
      %p49 = por %p47, %p48
      %p50 = scmp.ne.s32.totalorder %s42, %s44
      %p51 = scmp.eq.s32.totalorder %s27, 1
      %p52 = por %p50, %p51
      %p53 = scmp.ne.s32.totalorder %s44, %s45
      %p54 = scmp.eq.s32.totalorder %s27, 0
      %p55 = por %p53, %p54
      %p56 = scmp.ne.s32.totalorder %s44, %s45
      %p57 = scmp.eq.s32.totalorder %s28, 1
      %p58 = por %p56, %p57
      %p60 = scmp.ne.s32.totalorder %s45, %s59
      %p61 = scmp.eq.s32.totalorder %s28, 0
      %p62 = por %p60, %p61
      %s63 = ssub.s32 %s29, %s41
      %p64 = scmp.eq.s32.totalorder %s63, 0
      %s66 = sadd.s32 %s65, 1
      %s67 = scalar_select %p64, %s65, %s66
      %p70 = pneg %p64
      %p71 = scmp.eq.s32.totalorder %s22, 1
      %p72 = por %p70, %p71
      %p73 = scmp.ne.s32.totalorder %s65, %s68
      %p74 = scmp.eq.s32.totalorder %s22, 0
      %p75 = por %p73, %p74
      %p76 = scmp.ne.s32.totalorder %s65, %s68
      %p77 = scmp.eq.s32.totalorder %s27, 1
      %p78 = por %p76, %p77
      %p79 = scmp.ne.s32.totalorder %s68, %s69
      %p80 = scmp.eq.s32.totalorder %s27, 0
      %p81 = por %p79, %p80
      %p82 = scmp.ne.s32.totalorder %s68, %s69
      %p83 = scmp.eq.s32.totalorder %s28, 1
      %p84 = por %p82, %p83
      %p86 = scmp.ne.s32.totalorder %s69, %s85
      %p87 = scmp.eq.s32.totalorder %s28, 0
      %p88 = por %p86, %p87
      %s89 = ssub.s32 %s30, %s37
      %s90 = ssub.s32 %s29, %s41
      %s91 = sor.u32 %s89, %s90
      %p92 = scmp.eq.s32.totalorder %s91, 0
      %s94 = sadd.s32 %s93, 1
      %s95 = scalar_select %p92, %s93, %s94
      %p98 = pneg %p92
      %p99 = scmp.eq.s32.totalorder %s22, 1
      %p100 = por %p98, %p99
      %p101 = scmp.ne.s32.totalorder %s93, %s96
      %p102 = scmp.eq.s32.totalorder %s22, 0
      %p103 = por %p101, %p102
      %p104 = scmp.ne.s32.totalorder %s93, %s96
      %p105 = scmp.eq.s32.totalorder %s27, 1
      %p106 = por %p104, %p105
      %p107 = scmp.ne.s32.totalorder %s96, %s97
      %p108 = scmp.eq.s32.totalorder %s27, 0
      %p109 = por %p107, %p108
      %p110 = scmp.ne.s32.totalorder %s96, %s97
      %p111 = scmp.eq.s32.totalorder %s28, 1
      %p112 = por %p110, %p111
      %p114 = scmp.ne.s32.totalorder %s97, %s113
      %p115 = scmp.eq.s32.totalorder %s28, 0
      %p116 = por %p114, %p115
      %p117 = scmp.le.s32.totalorder 1, %s22
      %p118 = scmp.lt.s32.totalorder %s22, 3
      %p119 = pnand %p117, %p118
      %p120 = pneg %p119
      // Predicated region
      $region9: #{tpu_custom_call.1} parent=5 // pred_check
        _
      $region10: #{tpu_custom_call.1} parent=5 // pred_check_branch
        %122 = sbr.rel (%p119) target = $region12
      $region11: #{tpu_custom_call.1} parent=5 // pred_region
        %s123 = ssub.s32 %s22, 1
        // Predicated region
        $region13: #{tpu_custom_call.1} parent=11 // pred_check
          %p124 = pneg %p55
        $region14: #{tpu_custom_call.1} parent=11 // pred_check_branch
          %126 = sbr.rel (%p124) target = $region16
        $region15: #{tpu_custom_call.1} parent=11 // pred_region
          %128 = vsyncadd [#allocation5], 0
          %s129 = sshll.u32 %s1, 4
          %s130 = int_to_ptr.hbm [resolvable:$true] %s129
          %s131 = sshll.u32 [#allocation4], 4
          %s132 = int_to_ptr.vmem [resolvable:$true] %s131
          %137 = dma.hbm_to_vmem [thread:$0]  %s130, 1024, %s132, [#allocation5], 128, 128, 8
        $region16: #{tpu_custom_call.1} parent=11 // pred_fallthru
          _
        // Predicated region
        $region17: #{tpu_custom_call.1} parent=11 // pred_check
          %p138 = pneg %p81
        $region18: #{tpu_custom_call.1} parent=11 // pred_check_branch
          %140 = sbr.rel (%p138) target = $region20
        $region19: #{tpu_custom_call.1} parent=11 // pred_region
          %142 = vsyncadd [#allocation8], 0
          %s143 = smul.addr %s31, 8
          %s144 = scalar_lea.hbm %s2, %s143
          %s146 = sshll.u32 %s144, 4
          %s147 = int_to_ptr.hbm [resolvable:$true] %s146
          %s148 = sshll.u32 [#allocation7], 4
          %s149 = int_to_ptr.vmem [resolvable:$true] %s148
          %151 = dma.hbm_to_vmem [thread:$0]  %s147, 128, %s149, [#allocation8]
        $region20: #{tpu_custom_call.1} parent=11 // pred_fallthru
          _
      $region12: #{tpu_custom_call.1} parent=5 // pred_fallthru
        _
      %p152 = scmp.lt.s32.totalorder %s22, 2
      // Predicated region
      $region21: #{tpu_custom_call.1} parent=5 // pred_check
        %p153 = pneg %p152
      $region22: #{tpu_custom_call.1} parent=5 // pred_check_branch
        %155 = sbr.rel (%p153) target = $region24
      $region23: #{tpu_custom_call.1} parent=5 // pred_region
        _
      $region24: #{tpu_custom_call.1} parent=5 // pred_fallthru
        _
      %p156 = scmp.le.s32.totalorder 1, %s22
      %p157 = scmp.lt.s32.totalorder %s22, 3
      %p158 = pnand %p156, %p157
      %p159 = pneg %p158
      // Predicated region
      $region25: #{tpu_custom_call.1} parent=5 // pred_check
        _
      $region26: #{tpu_custom_call.1} parent=5 // pred_check_branch
        %161 = sbr.rel (%p158) target = $region28
      $region27: #{tpu_custom_call.1} parent=5 // pred_region
        %s162 = ssub.s32 %s22, 1
        // Predicated region
        $region29: #{tpu_custom_call.1} parent=27 // pred_check
          %p163 = pneg %p55
        $region30: #{tpu_custom_call.1} parent=27 // pred_check_branch
          %165 = sbr.rel (%p163) target = $region32
        $region31: #{tpu_custom_call.1} parent=27 // pred_region
          %167 = dma.done [#allocation5], 1024
        $region32: #{tpu_custom_call.1} parent=27 // pred_fallthru
          _
        // Predicated region
        $region33: #{tpu_custom_call.1} parent=27 // pred_check
          %p168 = pneg %p81
        $region34: #{tpu_custom_call.1} parent=27 // pred_check_branch
          %170 = sbr.rel (%p168) target = $region36
        $region35: #{tpu_custom_call.1} parent=27 // pred_region
          %172 = dma.done [#allocation8], 128
        $region36: #{tpu_custom_call.1} parent=27 // pred_fallthru
          _
        %p173 = pneg %p55
        %p174 = pneg %p52
        %p175 = pneg %p81
        %p176 = pneg %p78
        %p177 = pneg %p109
        %p178 = pneg %p106
        %s179 = sand.u32 %s96, 1
        %s180 = scalar_lea.sflag [#allocation6], %s179
        %s181 = sand.u32 %s96, 1
        %s182 = smul.addr %s181, 8
        %s183 = scalar_lea.vmem [#allocation9], %s182
        %s184 = smul.u32 %s32, 8
        %s185 = smul.u32 %s31, 8
        %s186 = sadd.s32 %s184, %s185
        %s187 = sld [smem:[#allocation3 + %s186]]
        %p188 = scmp.gt.s32.totalorder %s187, 0
        %s189 = scalar_select %p188, %s187, 0
        %p190 = scmp.lt.s32.totalorder %s189, 63
        %s191 = scalar_select %p190, %s189, 63
        %s192 = scalar_lea.vmem [#allocation4], %s191
        %v193 = vld [vmem:[%s192] sm:$0x1]
        %v194 = vld [vmem:[#allocation7] sm:$0x1]
        %v195 = vadd.f32 %v193, %v194
        %196 = vst [vmem:[%s183] sm:$0x1] %v195
        %s197 = sadd.s32 %s186, 1
        %s198 = sld [smem:[#allocation3 + %s197]]
        %p199 = scmp.gt.s32.totalorder %s198, 0
        %s200 = scalar_select %p199, %s198, 0
        %p201 = scmp.lt.s32.totalorder %s200, 63
        %s202 = scalar_select %p201, %s200, 63
        %s203 = scalar_lea.vmem [#allocation4], %s202
        %v204 = vld [vmem:[%s203] sm:$0x1]
        %v205 = vld [vmem:[#allocation7 + $0x1] sm:$0x1]
        %v206 = vadd.f32 %v204, %v205
        %207 = vst [vmem:[%s183 + $0x1] sm:$0x1] %v206
        %s208 = sadd.s32 %s186, 2
        %s209 = sld [smem:[#allocation3 + %s208]]
        %p210 = scmp.gt.s32.totalorder %s209, 0
        %s211 = scalar_select %p210, %s209, 0
        %p212 = scmp.lt.s32.totalorder %s211, 63
        %s213 = scalar_select %p212, %s211, 63
        %s214 = scalar_lea.vmem [#allocation4], %s213
        %v215 = vld [vmem:[%s214] sm:$0x1]
        %v216 = vld [vmem:[#allocation7 + $0x2] sm:$0x1]
        %v217 = vadd.f32 %v215, %v216
        %218 = vst [vmem:[%s183 + $0x2] sm:$0x1] %v217
        %s219 = sadd.s32 %s186, 3
        %s220 = sld [smem:[#allocation3 + %s219]]
        %p221 = scmp.gt.s32.totalorder %s220, 0
        %s222 = scalar_select %p221, %s220, 0
        %p223 = scmp.lt.s32.totalorder %s222, 63
        %s224 = scalar_select %p223, %s222, 63
        %s225 = scalar_lea.vmem [#allocation4], %s224
        %v226 = vld [vmem:[%s225] sm:$0x1]
        %v227 = vld [vmem:[#allocation7 + $0x3] sm:$0x1]
        %v228 = vadd.f32 %v226, %v227
        %229 = vst [vmem:[%s183 + $0x3] sm:$0x1] %v228
        %s230 = sadd.s32 %s186, 4
        %s231 = sld [smem:[#allocation3 + %s230]]
        %p232 = scmp.gt.s32.totalorder %s231, 0
        %s233 = scalar_select %p232, %s231, 0
        %p234 = scmp.lt.s32.totalorder %s233, 63
        %s235 = scalar_select %p234, %s233, 63
        %s236 = scalar_lea.vmem [#allocation4], %s235
        %v237 = vld [vmem:[%s236] sm:$0x1]
        %v238 = vld [vmem:[#allocation7 + $0x4] sm:$0x1]
        %v239 = vadd.f32 %v237, %v238
        %240 = vst [vmem:[%s183 + $0x4] sm:$0x1] %v239
        %s241 = sadd.s32 %s186, 5
        %s242 = sld [smem:[#allocation3 + %s241]]
        %p243 = scmp.gt.s32.totalorder %s242, 0
        %s244 = scalar_select %p243, %s242, 0
        %p245 = scmp.lt.s32.totalorder %s244, 63
        %s246 = scalar_select %p245, %s244, 63
        %s247 = scalar_lea.vmem [#allocation4], %s246
        %v248 = vld [vmem:[%s247] sm:$0x1]
        %v249 = vld [vmem:[#allocation7 + $0x5] sm:$0x1]
        %v250 = vadd.f32 %v248, %v249
        %251 = vst [vmem:[%s183 + $0x5] sm:$0x1] %v250
        %s252 = sadd.s32 %s186, 6
        %s253 = sld [smem:[#allocation3 + %s252]]
        %p254 = scmp.gt.s32.totalorder %s253, 0
        %s255 = scalar_select %p254, %s253, 0
        %p256 = scmp.lt.s32.totalorder %s255, 63
        %s257 = scalar_select %p256, %s255, 63
        %s258 = scalar_lea.vmem [#allocation4], %s257
        %v259 = vld [vmem:[%s258] sm:$0x1]
        %v260 = vld [vmem:[#allocation7 + $0x6] sm:$0x1]
        %v261 = vadd.f32 %v259, %v260
        %262 = vst [vmem:[%s183 + $0x6] sm:$0x1] %v261
        %s263 = sadd.s32 %s186, 7
        %s264 = sld [smem:[#allocation3 + %s263]]
        %p265 = scmp.gt.s32.totalorder %s264, 0
        %s266 = scalar_select %p265, %s264, 0
        %p267 = scmp.lt.s32.totalorder %s266, 63
        %s268 = scalar_select %p267, %s266, 63
        %s269 = scalar_lea.vmem [#allocation4], %s268
        %v270 = vld [vmem:[%s269] sm:$0x1]
        %v271 = vld [vmem:[#allocation7 + $0x7] sm:$0x1]
        %v272 = vadd.f32 %v270, %v271
        %273 = vst [vmem:[%s183 + $0x7] sm:$0x1] %v272
        %s274 = sand.u32 %s96, 1
        %s275 = scalar_lea.sflag [#allocation6], %s274
        %s276 = sand.u32 %s96, 1
        %s277 = smul.addr %s276, 8
        %s278 = scalar_lea.vmem [#allocation9], %s277
        // Predicated region
        $region37: #{tpu_custom_call.1} parent=27 // pred_check
          %p279 = pneg %p106
        $region38: #{tpu_custom_call.1} parent=27 // pred_check_branch
          %281 = sbr.rel (%p279) target = $region40
        $region39: #{tpu_custom_call.1} parent=27 // pred_region
          %283 = vsyncadd %s275, 0
          %s284 = sadd.s32 %s31, %s32
          %s285 = smul.addr %s284, 8
          %s286 = scalar_lea.hbm %s3, %s285
          %s288 = sshll.u32 %s278, 4
          %s289 = int_to_ptr.vmem [resolvable:$true] %s288
          %s290 = sshll.u32 %s286, 4
          %s291 = int_to_ptr.hbm [resolvable:$true] %s290
          %293 = dma.vmem_to_hbm [thread:$0]  %s289, 128, %s291, %s275
        $region40: #{tpu_custom_call.1} parent=27 // pred_fallthru
          _
      $region28: #{tpu_custom_call.1} parent=5 // pred_fallthru
        _
      %p294 = scmp.le.s32.totalorder 2, %s22
      // Predicated region
      $region41: #{tpu_custom_call.1} parent=5 // pred_check
        %p295 = pneg %p294
      $region42: #{tpu_custom_call.1} parent=5 // pred_check_branch
        %297 = sbr.rel (%p295) target = $region44
      $region43: #{tpu_custom_call.1} parent=5 // pred_region
        %s298 = ssub.s32 %s22, 2
        // Predicated region
        $region45: #{tpu_custom_call.1} parent=43 // pred_check
          %p299 = pneg %p112
        $region46: #{tpu_custom_call.1} parent=43 // pred_check_branch
          %301 = sbr.rel (%p299) target = $region48
        $region47: #{tpu_custom_call.1} parent=43 // pred_region
          %s302 = sand.u32 %s97, 1
          %s303 = scalar_lea.sflag [#allocation6], %s302
          %s304 = sand.u32 %s97, 1
          %s305 = smul.addr %s304, 8
          %s306 = scalar_lea.vmem [#allocation9], %s305
          %308 = dma.done %s303, 128
        $region48: #{tpu_custom_call.1} parent=43 // pred_fallthru
          _
      $region44: #{tpu_custom_call.1} parent=5 // pred_fallthru
        _
    $region6: #{tpu_custom_call.1} parent=1 // loop_footer
      %s26 = sadd.s32 1, %s22
    $region7: #{tpu_custom_call.1} parent=1 // loop_footer_branch
      %21 = sbr.rel target = $region3
    $region8: #{tpu_custom_call.1} parent=1 // loop_exit
      _
    %309 = vsyncpa [#allocation5], 1
    %s310 = scalar_lea.sflag [#allocation5], 1
    %311 = vsyncpa %s310, 1
    %312 = vsyncpa [#allocation8], 1
    %313 = vsyncpa [#allocation6], 1
    %s314 = scalar_lea.sflag [#allocation6], 1
    %315 = vsyncpa %s314, 1

</llo_original>
